<compile_context>
chip_gen: v7x
topology: tpu7x:2x2x1
jax: 0.10.0
libtpu: 0.0.40
codegen_flags: <defaults>
</compile_context>

<pallas_src>
import functools

import jax
import jax.numpy as jnp
from jax.experimental import pallas as pl
from jax.experimental.pallas import tpu as pltpu

HIDDEN = 768          # ST/BERT hidden size (fixed by nn.Linear(768, transform_dim))
TRANSFORM_DIM = 128   # transform_dim > 0 branch
VOCAB_SIZE = 30522    # default vocab of the module


def bert_pool_transform_kernel(
    ids_ref,        # SMEM (B_pad*S,) int32  -- scalar prefetch (flat: avoids 2-D SMEM padding)
    mask_ref,       # VMEM (BT, ST, 1) f32   -- attention-mask tile
    w_ref,          # VMEM (H, D)  f32       -- transform weight (resident, constant block)
    b_ref,          # VMEM (1, D)  f32       -- transform bias   (resident, constant block)
    tok_emb_hbm,    # ANY  (V, H)  f32       -- token-embedding table, stays in HBM
    out_ref,        # VMEM (BT, D) f32
    emb_scr,        # VMEM (2, BT*ST, H) f32 -- double-buffered gather scratch
    sum_scr,        # VMEM (BT, H) f32       -- masked-sum accumulator (lives across seq tiles)
    cnt_scr,        # VMEM (BT, 1) f32       -- mask-count accumulator
    sem,            # DMA semaphores (2,)    -- one per gather slot
    *,
    seq_len: int,
    b_tile: int,
    s_tile: int,
    hidden: int,
):
    bi = pl.program_id(0)
    si = pl.program_id(1)
    n_s = pl.num_programs(1)
    slot = si & 1

    def issue_tile(si_t, dst_slot):
        # One row DMA per token; nested loops avoid per-token scalar div/mod.
        @pl.loop(0, b_tile)
        def _rows(lb):
            base = (bi * b_tile + lb) * seq_len + si_t * s_tile

            @pl.loop(0, s_tile)
            def _cols(ls):
                row = ids_ref[base + ls]
                pltpu.make_async_copy(
                    tok_emb_hbm.at[pl.ds(row, 1), :],
                    emb_scr.at[dst_slot, pl.ds(lb * s_tile + ls, 1), :],
                    sem.at[dst_slot],
                ).start()

    # 1) Start of each batch-tile's sequence sweep: prime slot 0 and zero accumulators.
    @pl.when(si == 0)
    def _prime():
        issue_tile(0, 0)
        sum_scr[...] = jnp.zeros_like(sum_scr)
        cnt_scr[...] = jnp.zeros_like(cnt_scr)

    # 2) Prefetch the NEXT sequence tile into the other slot before waiting on the current
    #    one: descriptor issue overlaps in-flight data, and the DMA engine keeps working
    #    while we compute on the current slot.  Never crosses a batch-tile boundary, so it
    #    stays correct when the batch axis is split across cores.
    @pl.when(si + 1 < n_s)
    def _prefetch():
        issue_tile(si + 1, (si + 1) & 1)

    # 3) Single aggregate wait: every row copy of this slot signals the same semaphore, so
    #    one wait sized to the full slot buffer covers all of them (only the dst shape of
    #    the descriptor matters for the wait).
    pltpu.make_async_copy(emb_scr.at[slot], emb_scr.at[slot], sem.at[slot]).wait()

    # 4) Masked-sum accumulation; mask is (BT, ST, 1) so the hidden broadcast is a lane splat.
    emb = emb_scr[slot].reshape(b_tile, s_tile, hidden)   # regroup along sublane-tile boundary
    m = mask_ref[...]
    sum_scr[...] += jnp.sum(emb * m, axis=1)               # (BT, H)
    cnt_scr[...] += jnp.sum(m, axis=1)                     # (BT, 1)

    # 5) Finalize: mean pool, transform Linear, store (output block constant along si).
    @pl.when(si == n_s - 1)
    def _finalize():
        denom = jnp.maximum(cnt_scr[...], 1e-9)             # sentence-transformers clamp
        pooled = sum_scr[...] * pl.reciprocal(denom, approx=True)
        out_ref[...] = (
            jnp.dot(pooled, w_ref[...], preferred_element_type=jnp.float32) + b_ref[...]
        )


def bert_embedding_forward(input_ids, attention_mask, tok_emb, w, b, *, b_tile=8, s_tile=None):
    """Mirrors BERTEmbedding.forward(input_ids, attention_mask), transform_dim > 0 branch.

    tok_emb : (VOCAB, H) f32 synthetic encoder token-embedding table
    w       : (D, H)     f32 torch nn.Linear weight layout
    b       : (D,)       f32 bias
    """
    B, S = input_ids.shape
    V, H = tok_emb.shape
    D = w.shape[0]

    if s_tile is None:
        s_tile = S if S <= 128 else 128
    assert S % s_tile == 0, "sequence length must be a multiple of the sequence tile"

    # Pad batch to a multiple of the (sublane-aligned) batch tile; padded rows get mask=0
    # so they pool to exactly zero and are sliced off below.
    B_pad = ((B + b_tile - 1) // b_tile) * b_tile
    pad_b = B_pad - B
    ids = jnp.pad(input_ids.astype(jnp.int32), ((0, pad_b), (0, 0)))
    mask = jnp.pad(attention_mask.astype(jnp.float32), ((0, pad_b), (0, 0)))

    ids_flat = ids.reshape(-1)        # flat 1-D scalar prefetch (no 2-D SMEM padding blowup)
    mask3 = mask[:, :, None]          # (B_pad, S, 1): hidden-dim broadcast becomes a lane splat

    tok_emb_f32 = tok_emb.astype(jnp.float32)
    w_t = jnp.transpose(w).astype(jnp.float32)    # (H, D): kernel computes pooled @ w_t
    b2 = b.reshape(1, D).astype(jnp.float32)

    n_b = B_pad // b_tile
    n_s = S // s_tile

    kernel = functools.partial(
        bert_pool_transform_kernel,
        seq_len=S, b_tile=b_tile, s_tile=s_tile, hidden=H,
    )

    grid_spec = pltpu.PrefetchScalarGridSpec(
        num_scalar_prefetch=1,
        grid=(n_b, n_s),                                  # reduction (seq) axis last
        in_specs=[
            pl.BlockSpec((b_tile, s_tile, 1), lambda bi, si, ids: (bi, si, 0)),
            pl.BlockSpec((H, D), lambda bi, si, ids: (0, 0)),   # W: resident in VMEM
            pl.BlockSpec((1, D), lambda bi, si, ids: (0, 0)),   # bias: resident in VMEM
            pl.BlockSpec(memory_space=pl.ANY),                  # embedding table stays in HBM
        ],
        out_specs=pl.BlockSpec((b_tile, D), lambda bi, si, ids: (bi, 0)),
        scratch_shapes=[
            pltpu.VMEM((2, b_tile * s_tile, H), jnp.float32),   # double-buffered gather rows
            pltpu.VMEM((b_tile, H), jnp.float32),               # masked-sum accumulator
            pltpu.VMEM((b_tile, 1), jnp.float32),               # mask-count accumulator
            pltpu.SemaphoreType.DMA((2,)),                      # one sem per gather slot
        ],
    )

    out = pl.pallas_call(
        kernel,
        out_shape=jax.ShapeDtypeStruct((B_pad, D), jnp.float32),
        grid_spec=grid_spec,
        compiler_params=pltpu.CompilerParams(
            # batch tiles split across TensorCores on v7x; seq axis carries the accumulator.
            dimension_semantics=("parallel", "arbitrary"),
        ),
    )(ids_flat, mask3, w_t, b2, tok_emb_f32)

    return out[:B]


def _reference(input_ids, attention_mask, tok_emb, w, b):
    emb = jnp.take(tok_emb.astype(jnp.float32), input_ids, axis=0)
    mask = attention_mask.astype(jnp.float32)[:, :, None]
    pooled = jnp.sum(emb * mask, axis=1) / jnp.maximum(jnp.sum(mask, axis=1), 1e-9)
    return pooled @ w.T + b


if __name__ == "__main__":
    key = jax.random.PRNGKey(0)
    k_emb, k_w, k_b, k_ids = jax.random.split(key, 4)

    B, S = 2, 8

    # Deterministic synthetic parameters (shapes implied by the module's __init__).
    tok_emb = jax.random.normal(k_emb, (VOCAB_SIZE, HIDDEN), dtype=jnp.float32) * 0.02
    w = jax.random.normal(k_w, (TRANSFORM_DIM, HIDDEN), dtype=jnp.float32) * 0.02
    b = jax.random.normal(k_b, (TRANSFORM_DIM,), dtype=jnp.float32) * 0.02

    input_ids = jax.random.randint(k_ids, (B, S), 0, VOCAB_SIZE, dtype=jnp.int32)
    attention_mask = jnp.array(
        [[1, 1, 1, 1, 1, 1, 1, 1],
         [1, 1, 1, 1, 1, 1, 0, 0]], dtype=jnp.int32)

    out = bert_embedding_forward(input_ids, attention_mask, tok_emb, w, b)
    out = jax.block_until_ready(out)

    ref = _reference(input_ids, attention_mask, tok_emb, w, b)
    assert out.shape == (B, TRANSFORM_DIM)
    assert jnp.allclose(out, ref, atol=1e-3, rtol=1e-3), "mismatch vs JAX reference"

    print("KERNEL_OK")
</pallas_src>

<mosaic_0001>
module attributes {stable_mosaic.version = 11 : i64} {
  func.func @bert_pool_transform_kernel(%arg0: i32, %arg1: i32, %arg2: memref<64xi32, #tpu.memory_space<smem>>, %arg3: memref<8x8x1xf32, #tpu.memory_space<vmem>>, %arg4: memref<768x128xf32, #tpu.memory_space<vmem>>, %arg5: memref<1x128xf32, #tpu.memory_space<vmem>>, %arg6: memref<30522x768xf32, #tpu.memory_space<any>>, %arg7: memref<8x128xf32, #tpu.memory_space<vmem>>, %arg8: memref<2x64x768xf32, #tpu.memory_space<vmem>>, %arg9: memref<8x768xf32, #tpu.memory_space<vmem>>, %arg10: memref<8x1xf32, #tpu.memory_space<vmem>>, %arg11: memref<2x!tpu.dma_semaphore, #tpu.memory_space<semaphore_mem>>) attributes {dimension_semantics = [#tpu.dimension_semantics<parallel>, #tpu.dimension_semantics<arbitrary>], iteration_bounds = array<i64: 1, 1>, scalar_prefetch = 1 : i64, scratch_operands = 4 : i64, tpu.core_type = #tpu.core_type<tc>, window_params = [{transform_indices = @transform_0, window_bounds = array<i64: 8, 8, 1>}, {pipeline_mode = #tpu.pipeline_mode<synchronous>, transform_indices = @transform_1, window_bounds = array<i64: 768, 128>}, {pipeline_mode = #tpu.pipeline_mode<synchronous>, transform_indices = @transform_2, window_bounds = array<i64: 1, 128>}, {}, {transform_indices = @transform_4, window_bounds = array<i64: 8, 128>}]} {
    %c1_i32 = arith.constant 1 : i32
    %0 = arith.andi %arg1, %c1_i32 : i32
    %c0_i32 = arith.constant 0 : i32
    %1 = arith.cmpi eq, %arg1, %c0_i32 : i32
    %2 = arith.extui %1 : i1 to i32
    %c0_i32_0 = arith.constant 0 : i32
    %3 = arith.cmpi ne, %2, %c0_i32_0 : i32
    scf.if %3 {
      %c0_i32_23 = arith.constant 0 : i32
      %c8_i32 = arith.constant 8 : i32
      %32 = arith.addi %c0_i32_23, %c8_i32 : i32
      %c1_i32_24 = arith.constant 1 : i32
      scf.for %arg12 = %c0_i32_23 to %32 step %c1_i32_24  : i32 {
        %c1_i32_32 = arith.constant 1 : i32
        %37 = arith.muli %arg12, %c1_i32_32 : i32
        %c0_i32_33 = arith.constant 0 : i32
        %38 = arith.addi %c0_i32_33, %37 : i32
        %c8_i32_34 = arith.constant 8 : i32
        %39 = arith.muli %arg0, %c8_i32_34 : i32
        %40 = arith.addi %39, %38 : i32
        %c8_i32_35 = arith.constant 8 : i32
        %41 = arith.muli %40, %c8_i32_35 : i32
        %c0_i32_36 = arith.constant 0 : i32
        %42 = arith.addi %41, %c0_i32_36 : i32
        %c0_i32_37 = arith.constant 0 : i32
        %c8_i32_38 = arith.constant 8 : i32
        %43 = arith.addi %c0_i32_37, %c8_i32_38 : i32
        %c1_i32_39 = arith.constant 1 : i32
        scf.for %arg13 = %c0_i32_37 to %43 step %c1_i32_39  : i32 {
          %c1_i32_41 = arith.constant 1 : i32
          %44 = arith.muli %arg13, %c1_i32_41 : i32
          %c0_i32_42 = arith.constant 0 : i32
          %45 = arith.addi %c0_i32_42, %44 : i32
          %46 = arith.addi %42, %45 : i32
          %47 = arith.index_cast %46 : i32 to index
          %48 = memref.load %arg2[%47] : memref<64xi32, #tpu.memory_space<smem>>
          %c8_i32_43 = arith.constant 8 : i32
          %49 = arith.muli %38, %c8_i32_43 : i32
          %50 = arith.addi %49, %45 : i32
          %c0_i32_44 = arith.constant 0 : i32
          %c0_i32_45 = arith.constant 0 : i32
          %c0_i32_46 = arith.constant 0 : i32
          %51 = tpu.memref_slice %arg6[%48, %c0_i32_46] : memref<30522x768xf32, #tpu.memory_space<any>> -> memref<1x768xf32, #tpu.memory_space<any>>
          %c0_i32_47 = arith.constant 0 : i32
          %52 = tpu.memref_slice %arg8[%c0_i32_44, %50, %c0_i32_47] : memref<2x64x768xf32, #tpu.memory_space<vmem>> -> memref<1x1x768xf32, #tpu.memory_space<vmem>>
          %53 = tpu.memref_squeeze %52 : memref<1x1x768xf32, #tpu.memory_space<vmem>> -> memref<1x768xf32, #tpu.memory_space<vmem>>
          %54 = tpu.memref_slice %arg11[%c0_i32_45] : memref<2x!tpu.dma_semaphore, #tpu.memory_space<semaphore_mem>> -> memref<1x!tpu.dma_semaphore, #tpu.memory_space<semaphore_mem>>
          %55 = tpu.memref_squeeze %54 : memref<1x!tpu.dma_semaphore, #tpu.memory_space<semaphore_mem>> -> memref<!tpu.dma_semaphore, #tpu.memory_space<semaphore_mem>>
          tpu.enqueue_dma source(%51 : memref<1x768xf32, #tpu.memory_space<any>>) target(%53 : memref<1x768xf32, #tpu.memory_space<vmem>>) target_semaphore(%55 : memref<!tpu.dma_semaphore, #tpu.memory_space<semaphore_mem>>)
        }
        %c8_i32_40 = arith.constant 8 : i32
      }
      %c8_i32_25 = arith.constant 8 : i32
      %cst_26 = arith.constant 0.000000e+00 : f32
      %33 = vector.broadcast %cst_26 : f32 to vector<8x768xf32>
      %c0_27 = arith.constant 0 : index
      %c0_28 = arith.constant 0 : index
      %34 = vector.load %arg9[%c0_27, %c0_28] : memref<8x768xf32, #tpu.memory_space<vmem>>, vector<8x768xf32>
      tpu.vector_store %arg9[%c0_27, %c0_28], %33 {strides = array<i32>} : memref<8x768xf32, #tpu.memory_space<vmem>>, vector<8x768xf32>,
      %cst_29 = arith.constant 0.000000e+00 : f32
      %35 = vector.broadcast %cst_29 : f32 to vector<8x1xf32>
      %c0_30 = arith.constant 0 : index
      %c0_31 = arith.constant 0 : index
      %36 = vector.load %arg10[%c0_30, %c0_31] : memref<8x1xf32, #tpu.memory_space<vmem>>, vector<8x1xf32>
      tpu.vector_store %arg10[%c0_30, %c0_31], %35 {strides = array<i32>} : memref<8x1xf32, #tpu.memory_space<vmem>>, vector<8x1xf32>,
    } else {
    }
    %c1_i32_1 = arith.constant 1 : i32
    %4 = arith.addi %arg1, %c1_i32_1 : i32
    %c1_i32_2 = arith.constant 1 : i32
    %5 = arith.cmpi slt, %4, %c1_i32_2 : i32
    %6 = arith.extui %5 : i1 to i32
    %c0_i32_3 = arith.constant 0 : i32
    %7 = arith.cmpi ne, %6, %c0_i32_3 : i32
    scf.if %7 {
      %c1_i32_23 = arith.constant 1 : i32
      %32 = arith.addi %arg1, %c1_i32_23 : i32
      %c1_i32_24 = arith.constant 1 : i32
      %33 = arith.addi %arg1, %c1_i32_24 : i32
      %c1_i32_25 = arith.constant 1 : i32
      %34 = arith.andi %33, %c1_i32_25 : i32
      %c0_i32_26 = arith.constant 0 : i32
      %c8_i32 = arith.constant 8 : i32
      %35 = arith.addi %c0_i32_26, %c8_i32 : i32
      %c1_i32_27 = arith.constant 1 : i32
      scf.for %arg12 = %c0_i32_26 to %35 step %c1_i32_27  : i32 {
        %c1_i32_29 = arith.constant 1 : i32
        %36 = arith.muli %arg12, %c1_i32_29 : i32
        %c0_i32_30 = arith.constant 0 : i32
        %37 = arith.addi %c0_i32_30, %36 : i32
        %c8_i32_31 = arith.constant 8 : i32
        %38 = arith.muli %arg0, %c8_i32_31 : i32
        %39 = arith.addi %38, %37 : i32
        %c8_i32_32 = arith.constant 8 : i32
        %40 = arith.muli %39, %c8_i32_32 : i32
        %c8_i32_33 = arith.constant 8 : i32
        %41 = arith.muli %32, %c8_i32_33 : i32
        %42 = arith.addi %40, %41 : i32
        %c0_i32_34 = arith.constant 0 : i32
        %c8_i32_35 = arith.constant 8 : i32
        %43 = arith.addi %c0_i32_34, %c8_i32_35 : i32
        %c1_i32_36 = arith.constant 1 : i32
        scf.for %arg13 = %c0_i32_34 to %43 step %c1_i32_36  : i32 {
          %c1_i32_38 = arith.constant 1 : i32
          %44 = arith.muli %arg13, %c1_i32_38 : i32
          %c0_i32_39 = arith.constant 0 : i32
          %45 = arith.addi %c0_i32_39, %44 : i32
          %46 = arith.addi %42, %45 : i32
          %47 = arith.index_cast %46 : i32 to index
          %48 = memref.load %arg2[%47] : memref<64xi32, #tpu.memory_space<smem>>
          %c8_i32_40 = arith.constant 8 : i32
          %49 = arith.muli %37, %c8_i32_40 : i32
          %50 = arith.addi %49, %45 : i32
          %c0_i32_41 = arith.constant 0 : i32
          %51 = tpu.memref_slice %arg6[%48, %c0_i32_41] : memref<30522x768xf32, #tpu.memory_space<any>> -> memref<1x768xf32, #tpu.memory_space<any>>
          %c0_i32_42 = arith.constant 0 : i32
          %52 = tpu.memref_slice %arg8[%34, %50, %c0_i32_42] : memref<2x64x768xf32, #tpu.memory_space<vmem>> -> memref<1x1x768xf32, #tpu.memory_space<vmem>>
          %53 = tpu.memref_squeeze %52 : memref<1x1x768xf32, #tpu.memory_space<vmem>> -> memref<1x768xf32, #tpu.memory_space<vmem>>
          %54 = tpu.memref_slice %arg11[%34] : memref<2x!tpu.dma_semaphore, #tpu.memory_space<semaphore_mem>> -> memref<1x!tpu.dma_semaphore, #tpu.memory_space<semaphore_mem>>
          %55 = tpu.memref_squeeze %54 : memref<1x!tpu.dma_semaphore, #tpu.memory_space<semaphore_mem>> -> memref<!tpu.dma_semaphore, #tpu.memory_space<semaphore_mem>>
          tpu.enqueue_dma source(%51 : memref<1x768xf32, #tpu.memory_space<any>>) target(%53 : memref<1x768xf32, #tpu.memory_space<vmem>>) target_semaphore(%55 : memref<!tpu.dma_semaphore, #tpu.memory_space<semaphore_mem>>)
        }
        %c8_i32_37 = arith.constant 8 : i32
      }
      %c8_i32_28 = arith.constant 8 : i32
    } else {
    }
    %c0_i32_4 = arith.constant 0 : i32
    %c0_i32_5 = arith.constant 0 : i32
    %8 = tpu.memref_slice %arg8[%0, %c0_i32_4, %c0_i32_5] : memref<2x64x768xf32, #tpu.memory_space<vmem>> -> memref<1x64x768xf32, #tpu.memory_space<vmem>>
    %9 = tpu.memref_squeeze %8 : memref<1x64x768xf32, #tpu.memory_space<vmem>> -> memref<64x768xf32, #tpu.memory_space<vmem>>
    %c0_i32_6 = arith.constant 0 : i32
    %c0_i32_7 = arith.constant 0 : i32
    %10 = tpu.memref_slice %arg8[%0, %c0_i32_6, %c0_i32_7] : memref<2x64x768xf32, #tpu.memory_space<vmem>> -> memref<1x64x768xf32, #tpu.memory_space<vmem>>
    %11 = tpu.memref_squeeze %10 : memref<1x64x768xf32, #tpu.memory_space<vmem>> -> memref<64x768xf32, #tpu.memory_space<vmem>>
    %12 = tpu.memref_slice %arg11[%0] : memref<2x!tpu.dma_semaphore, #tpu.memory_space<semaphore_mem>> -> memref<1x!tpu.dma_semaphore, #tpu.memory_space<semaphore_mem>>
    %13 = tpu.memref_squeeze %12 : memref<1x!tpu.dma_semaphore, #tpu.memory_space<semaphore_mem>> -> memref<!tpu.dma_semaphore, #tpu.memory_space<semaphore_mem>>
    tpu.wait_dma2 semaphore(%13 : memref<!tpu.dma_semaphore, #tpu.memory_space<semaphore_mem>>) src(%9 : memref<64x768xf32, #tpu.memory_space<vmem>>) dst(%11 : memref<64x768xf32, #tpu.memory_space<vmem>>)
    %14 = arith.index_cast %0 : i32 to index
    %c0 = arith.constant 0 : index
    %c0_8 = arith.constant 0 : index
    %15 = vector.load %arg8[%14, %c0, %c0_8] : memref<2x64x768xf32, #tpu.memory_space<vmem>>, vector<1x64x768xf32>
    %16 = vector.shape_cast %15 : vector<1x64x768xf32> to vector<64x768xf32>
    %17 = vector.shape_cast %16 : vector<64x768xf32> to vector<8x8x768xf32>
    %c0_9 = arith.constant 0 : index
    %c0_10 = arith.constant 0 : index
    %c0_11 = arith.constant 0 : index
    %18 = vector.load %arg3[%c0_9, %c0_10, %c0_11] : memref<8x8x1xf32, #tpu.memory_space<vmem>>, vector<8x8x1xf32>
    %c0_12 = arith.constant 0 : index
    %c0_13 = arith.constant 0 : index
    %19 = vector.load %arg9[%c0_12, %c0_13] : memref<8x768xf32, #tpu.memory_space<vmem>>, vector<8x768xf32>
    %20 = vector.broadcast %18 : vector<8x8x1xf32> to vector<8x8x768xf32>
    %21 = arith.mulf %17, %20 : vector<8x8x768xf32>
    %cst = arith.constant dense<0.000000e+00> : vector<8x768xf32>
    %22 = vector.multi_reduction <add>, %21, %cst [1] : vector<8x8x768xf32> to vector<8x768xf32>
    %23 = arith.addf %19, %22 : vector<8x768xf32>
    %c0_14 = arith.constant 0 : index
    %c0_15 = arith.constant 0 : index
    %24 = vector.load %arg9[%c0_14, %c0_15] : memref<8x768xf32, #tpu.memory_space<vmem>>, vector<8x768xf32>
    tpu.vector_store %arg9[%c0_14, %c0_15], %23 {strides = array<i32>} : memref<8x768xf32, #tpu.memory_space<vmem>>, vector<8x768xf32>,
    %c0_16 = arith.constant 0 : index
    %c0_17 = arith.constant 0 : index
    %25 = vector.load %arg10[%c0_16, %c0_17] : memref<8x1xf32, #tpu.memory_space<vmem>>, vector<8x1xf32>
    %cst_18 = arith.constant dense<0.000000e+00> : vector<8x1xf32>
    %26 = vector.multi_reduction <add>, %18, %cst_18 [1] : vector<8x8x1xf32> to vector<8x1xf32>
    %27 = arith.addf %25, %26 : vector<8x1xf32>
    %c0_19 = arith.constant 0 : index
    %c0_20 = arith.constant 0 : index
    %28 = vector.load %arg10[%c0_19, %c0_20] : memref<8x1xf32, #tpu.memory_space<vmem>>, vector<8x1xf32>
    tpu.vector_store %arg10[%c0_19, %c0_20], %27 {strides = array<i32>} : memref<8x1xf32, #tpu.memory_space<vmem>>, vector<8x1xf32>,
    %c0_i32_21 = arith.constant 0 : i32
    %29 = arith.cmpi eq, %arg1, %c0_i32_21 : i32
    %30 = arith.extui %29 : i1 to i32
    %c0_i32_22 = arith.constant 0 : i32
    %31 = arith.cmpi ne, %30, %c0_i32_22 : i32
    scf.if %31 {
      %c0_23 = arith.constant 0 : index
      %c0_24 = arith.constant 0 : index
      %32 = vector.load %arg10[%c0_23, %c0_24] : memref<8x1xf32, #tpu.memory_space<vmem>>, vector<8x1xf32>
      %cst_25 = arith.constant 9.99999971E-10 : f32
      %33 = vector.broadcast %cst_25 : f32 to vector<8x1xf32>
      %34 = arith.maximumf %32, %33 : vector<8x1xf32>
      %c0_26 = arith.constant 0 : index
      %c0_27 = arith.constant 0 : index
      %35 = vector.load %arg9[%c0_26, %c0_27] : memref<8x768xf32, #tpu.memory_space<vmem>>, vector<8x768xf32>
      %36 = tpu.reciprocal %34 {approx = true} : vector<8x1xf32> -> vector<8x1xf32>
      %37 = vector.broadcast %36 : vector<8x1xf32> to vector<8x768xf32>
      %38 = arith.mulf %35, %37 : vector<8x768xf32>
      %c0_28 = arith.constant 0 : index
      %c0_29 = arith.constant 0 : index
      %39 = vector.load %arg4[%c0_28, %c0_29] : memref<768x128xf32, #tpu.memory_space<vmem>>, vector<768x128xf32>
      %cst_30 = arith.constant dense<0.000000e+00> : vector<8x128xf32>
      %40 = tpu.matmul %38, %39, %cst_30 {dimension_numbers = #tpu.dot_dimension_numbers<[1], [0], [0], [1], [0, 0, 1, 1], [], []>} : vector<8x768xf32>, vector<768x128xf32>, vector<8x128xf32> -> vector<8x128xf32>
      %c0_31 = arith.constant 0 : index
      %c0_32 = arith.constant 0 : index
      %41 = vector.load %arg5[%c0_31, %c0_32] : memref<1x128xf32, #tpu.memory_space<vmem>>, vector<1x128xf32>
      %42 = vector.broadcast %41 : vector<1x128xf32> to vector<8x128xf32>
      %43 = arith.addf %40, %42 : vector<8x128xf32>
      %c0_33 = arith.constant 0 : index
      %c0_34 = arith.constant 0 : index
      %44 = vector.load %arg7[%c0_33, %c0_34] : memref<8x128xf32, #tpu.memory_space<vmem>>, vector<8x128xf32>
      tpu.vector_store %arg7[%c0_33, %c0_34], %43 {strides = array<i32>} : memref<8x128xf32, #tpu.memory_space<vmem>>, vector<8x128xf32>,
    } else {
    }
    return
  }
  func.func @transform_0(%arg0: i32, %arg1: i32, %arg2: memref<64xi32, #tpu.memory_space<smem>>) -> (i32, i32, i32) {
    %c0_i32 = arith.constant 0 : i32
    %c0_i32_0 = arith.constant 0 : i32
    return %arg0, %arg1, %c0_i32 : i32, i32, i32
  }
  func.func @transform_1(%arg0: i32, %arg1: i32, %arg2: memref<64xi32, #tpu.memory_space<smem>>) -> (i32, i32) {
    %c0_i32 = arith.constant 0 : i32
    %c0_i32_0 = arith.constant 0 : i32
    %c0_i32_1 = arith.constant 0 : i32
    return %c0_i32, %c0_i32_0 : i32, i32
  }
  func.func @transform_2(%arg0: i32, %arg1: i32, %arg2: memref<64xi32, #tpu.memory_space<smem>>) -> (i32, i32) {
    %c0_i32 = arith.constant 0 : i32
    %c0_i32_0 = arith.constant 0 : i32
    %c0_i32_1 = arith.constant 0 : i32
    return %c0_i32, %c0_i32_0 : i32, i32
  }
  func.func @transform_4(%arg0: i32, %arg1: i32, %arg2: memref<64xi32, #tpu.memory_space<smem>>) -> (i32, i32) {
    %c0_i32 = arith.constant 0 : i32
    %c0_i32_0 = arith.constant 0 : i32
    return %arg0, %c0_i32 : i32, i32
  }
}

</mosaic_0001>

<llo_original>
// kernel: tpu_custom_call.1
$region0: #{tpu_custom_call.1}
  #allocation0 [shape = 'u32[]', space=smem, size = 0x4, offset = 0x4, fixed_abs, tag = 'smem constant byte address 0x4 - core index']
  #allocation1 [shape = 'u32[144,128]{1,0:T(1,128)}', space=vmem, size = 0x12000, scoped, tag = 'internal scratch']
  #allocation2 [shape = 'f32[2,64,768]{2,1,0:T(8,128)}', space=vmem, size = 0x60000, scoped, tag = 'scratch operand']
  #allocation3 [shape = 'f32[8,768]{1,0:T(8,128)}', space=vmem, size = 0x6000, scoped, tag = 'scratch operand']
  #allocation4 [shape = 'f32[8,1]{1,0:T(8,128)}', space=vmem, size = 0x1000, scoped, tag = 'scratch operand']
  #allocation5 [shape = 's32[2]{0}', space=sflag, size = 0x8, scoped, tag = 'scratch operand']
  #allocation6 [shape = 's32[1]{0}', space=sflag, size = 0x4, scoped, tag = 'scoped memory for tpu_custom_call.1']
  #allocation7 [shape = 'u8[512]{0}', space=smem, size = 0x200, scoped, tag = 'prefetched SMEM operand 0']
  #allocation14 [shape = 's32[]', space=sflag, size = 0x4, offset = 0, fixed_abs, tag = 'sflag constant byte address 0x0 - dummy sync flag']
  #allocation15 [shape = 's32[]', space=sflag, size = 0x4, offset = 0, fixed_abs, tag = 'sflag constant byte address 0x0 - dummy sync flag']
  %s0 = inlined_call_operand.hbm [shape: s32[64], index: 0, kind: input, shape index: {}]
  %s1 = inlined_call_operand.vmem [shape: f32[8,8,1], index: 1, kind: input, shape index: {}]
  %s2 = inlined_call_operand.hbm [shape: f32[768,128], index: 2, kind: input, shape index: {}]
  %s3 = inlined_call_operand.hbm [shape: f32[1,128], index: 3, kind: input, shape index: {}]
  %s4 = inlined_call_operand.hbm [shape: f32[30522,768], index: 4, kind: input, shape index: {}]
  %s5 = inlined_call_operand.hbm [shape: f32[8,128], index: 5, kind: output, shape index: {}]
  %s6 = sld [smem:[#allocation0]]
  $region70: #{tpu_custom_call.1} parent=0
    _
  %s8 = ssub.s32 1, %s6
  %s9 = scalar_select 0, %s8, %s6
  %11 = dma.hbm_to_smem %s0, 16, [#allocation7], [#allocation6]
  %12 = dma.done [#allocation6], 16
  %13 = sfence
  $region1: #{tpu_custom_call.1} parent=0
    #allocation8 [shape = 'u8[393216]{0}', space=vmem, size = 0x60000, scoped, tag = 'input window, operand 2, single buffered']
    #allocation9 [shape = 's32[1]{0}', space=sflag, size = 0x4, scoped, tag = 'scoped memory for tpu_custom_call.1']
    #allocation10 [shape = 's32[1]{0}', space=sflag, size = 0x4, scoped, tag = 'scoped memory for tpu_custom_call.1']
    #allocation11 [shape = 'u8[512]{0}', space=vmem, size = 0x400, scoped, tag = 'input window, operand 3, single buffered']
    #allocation12 [shape = 's32[1]{0}', space=sflag, size = 0x4, scoped, tag = 'scoped memory for tpu_custom_call.1']
    #allocation13 [shape = 'u8[4096]{0}', space=vmem, size = 0x1000, scoped, tag = 'output window, operand 0, single buffered']
    %14 = vsyncpa [#allocation9], 0
    %15 = vsyncpa [#allocation12], 0
    %16 = vsyncpa [#allocation10], 0
    // Predicated region
    $region2: #{tpu_custom_call.1} parent=1 // pred_check
      _
    $region3: #{tpu_custom_call.1} parent=1 // pred_check_branch
      %18 = sbr.rel (0) target = $region5
    $region4: #{tpu_custom_call.1} parent=1 // pred_region
      _
    $region5: #{tpu_custom_call.1} parent=1 // pred_fallthru
      _
    // Predicated region
    $region6: #{tpu_custom_call.1} parent=1 // pred_check
      _
    $region7: #{tpu_custom_call.1} parent=1 // pred_check_branch
      %20 = sbr.rel (0) target = $region9
    $region8: #{tpu_custom_call.1} parent=1 // pred_region
      %s22 = ssub.s32 12288, 12288
      %23 = vsyncadd [#allocation9], %s22
      %s24 = sshll.u32 [#allocation8], 4
      %s25 = int_to_ptr.vmem [resolvable:$true] %s24
      %30 = dma.hbm_to_vmem [thread:$0]  %s2, 12288, %s25, [#allocation9], 128, 128, 8
    $region9: #{tpu_custom_call.1} parent=1 // pred_fallthru
      _
    // Predicated region
    $region10: #{tpu_custom_call.1} parent=1 // pred_check
      _
    $region11: #{tpu_custom_call.1} parent=1 // pred_check_branch
      %32 = sbr.rel (0) target = $region13
    $region12: #{tpu_custom_call.1} parent=1 // pred_region
      %s34 = ssub.s32 16, 16
      %35 = vsyncadd [#allocation12], %s34
      %s37 = sshll.u32 [#allocation11], 4
      %s38 = int_to_ptr.vmem [resolvable:$true] %s37
      %40 = dma.hbm_to_vmem [thread:$0]  %s3, 16, %s38, [#allocation12]
    $region13: #{tpu_custom_call.1} parent=1 // pred_fallthru
      _
    // Predicated region
    $region14: #{tpu_custom_call.1} parent=1 // pred_check
      _
    $region15: #{tpu_custom_call.1} parent=1 // pred_check_branch
      %42 = sbr.rel (0) target = $region17
    $region16: #{tpu_custom_call.1} parent=1 // pred_region
      %43 = dma.done [#allocation9], 12288
    $region17: #{tpu_custom_call.1} parent=1 // pred_fallthru
      _
    // Predicated region
    $region18: #{tpu_custom_call.1} parent=1 // pred_check
      _
    $region19: #{tpu_custom_call.1} parent=1 // pred_check_branch
      %45 = sbr.rel (0) target = $region21
    $region20: #{tpu_custom_call.1} parent=1 // pred_region
      %46 = dma.done [#allocation12], 16
    $region21: #{tpu_custom_call.1} parent=1 // pred_fallthru
      _
    %s47 = sand.u32 0, 1
    %p48 = scmp.eq.s32.totalorder 0, 0
    // Predicated region
    $region22: #{tpu_custom_call.1} parent=1 // pred_check
      %p49 = pneg %p48
    $region23: #{tpu_custom_call.1} parent=1 // pred_check_branch
      %51 = sbr.rel (%p49) target = $region25
    $region24: #{tpu_custom_call.1} parent=1 // pred_region
      loop: start=0, step=1, limit=8
      $region26: #{tpu_custom_call.1} parent=24 // loop_pre_header
        _
      $region27: #{tpu_custom_call.1} parent=24 // loop_header
        %s53 = sphi 0, %s57
        %p54 = scmp.ge.s32.totalorder %s53, 8
      $region28: #{tpu_custom_call.1} parent=24 // loop_header_branch
        %56 = sbr.rel (%p54) target = $region32
      $region29: #{tpu_custom_call.1} parent=24 // loop_body
        %s58 = smul.u32 0, 8
        %s59 = sadd.s32 %s58, %s53
        %s60 = smul.u32 %s59, 8
        loop: start=0, step=1, limit=8
        $region33: #{tpu_custom_call.1} parent=29 // loop_pre_header
          _
        $region34: #{tpu_custom_call.1} parent=29 // loop_header
          %s62 = sphi 0, %s66
          %p63 = scmp.ge.s32.totalorder %s62, 8
        $region35: #{tpu_custom_call.1} parent=29 // loop_header_branch
          %65 = sbr.rel (%p63) target = $region39
        $region36: #{tpu_custom_call.1} parent=29 // loop_body
          %s67 = sadd.s32 %s60, %s62
          %s68 = sld [smem:[#allocation7 + %s67]]
          %s69 = smul.u32 %s53, 8
          %s70 = sadd.s32 %s69, %s62
          %s71 = sshrl.u32 %s68, 3
          %s72 = sand.u32 %s68, 7
          %s73 = smul.u32 %s71, 48
          %s74 = sadd.s32 %s72, %s73
          %s75 = smul.addr %s74, 16
          %s76 = scalar_lea.hbm %s4, %s75
          %s77 = sshrl.u32 %s70, 3
          %s78 = sand.u32 %s70, 7
          %s79 = smul.u32 %s77, 48
          %s80 = sadd.s32 %s78, %s79
          %s81 = scalar_lea.vmem [#allocation2], %s80
          %s83 = sshll.u32 %s81, 4
          %s84 = int_to_ptr.vmem [resolvable:$true] %s83
          %86 = dma.hbm_to_vmem [thread:$0]  %s76, 96, %s84, [#allocation5], 128, 128, 1
        $region37: #{tpu_custom_call.1} parent=29 // loop_footer
          %s66 = sadd.s32 1, %s62
        $region38: #{tpu_custom_call.1} parent=29 // loop_footer_branch
          %61 = sbr.rel target = $region34
        $region39: #{tpu_custom_call.1} parent=29 // loop_exit
          _
      $region30: #{tpu_custom_call.1} parent=24 // loop_footer
        %s57 = sadd.s32 1, %s53
      $region31: #{tpu_custom_call.1} parent=24 // loop_footer_branch
        %52 = sbr.rel target = $region27
      $region32: #{tpu_custom_call.1} parent=24 // loop_exit
        _
      %87 = vst [vmem:[#allocation3] sm:$0xff] 0.0
      %88 = vst [vmem:[#allocation3 + $0x8] sm:$0xff] 0.0
      %89 = vst [vmem:[#allocation3 + $0x10] sm:$0xff] 0.0
      %90 = vst [vmem:[#allocation3 + $0x18] sm:$0xff] 0.0
      %91 = vst [vmem:[#allocation3 + $0x20] sm:$0xff] 0.0
      %92 = vst [vmem:[#allocation3 + $0x28] sm:$0xff] 0.0
      %vm93 = vcmask 7168
      %94 = vst.msk [vmem:[#allocation4] sm:$0xff] %vm93, 0.0
    $region25: #{tpu_custom_call.1} parent=1 // pred_fallthru
      _
    %s95 = sadd.s32 0, 1
    %p96 = scmp.lt.s32.totalorder %s95, 1
    // Predicated region
    $region40: #{tpu_custom_call.1} parent=1 // pred_check
      %p97 = pneg %p96
    $region41: #{tpu_custom_call.1} parent=1 // pred_check_branch
      %99 = sbr.rel (%p97) target = $region43
    $region42: #{tpu_custom_call.1} parent=1 // pred_region
      %s100 = sand.u32 %s95, 1
      loop: start=0, step=1, limit=8
      $region44: #{tpu_custom_call.1} parent=42 // loop_pre_header
        _
      $region45: #{tpu_custom_call.1} parent=42 // loop_header
        %s102 = sphi 0, %s106
        %p103 = scmp.ge.s32.totalorder %s102, 8
      $region46: #{tpu_custom_call.1} parent=42 // loop_header_branch
        %105 = sbr.rel (%p103) target = $region50
      $region47: #{tpu_custom_call.1} parent=42 // loop_body
        %s107 = smul.u32 0, 8
        %s108 = sadd.s32 %s107, %s102
        %s109 = smul.u32 %s108, 8
        %s110 = smul.u32 %s95, 8
        %s111 = sadd.s32 %s109, %s110
        loop: start=0, step=1, limit=8
        $region51: #{tpu_custom_call.1} parent=47 // loop_pre_header
          _
        $region52: #{tpu_custom_call.1} parent=47 // loop_header
          %s113 = sphi 0, %s117
          %p114 = scmp.ge.s32.totalorder %s113, 8
        $region53: #{tpu_custom_call.1} parent=47 // loop_header_branch
          %116 = sbr.rel (%p114) target = $region57
        $region54: #{tpu_custom_call.1} parent=47 // loop_body
          %s118 = sadd.s32 %s111, %s113
          %s119 = sld [smem:[#allocation7 + %s118]]
          %s120 = smul.u32 %s102, 8
          %s121 = sadd.s32 %s120, %s113
          %s122 = sshrl.u32 %s119, 3
          %s123 = sand.u32 %s119, 7
          %s124 = smul.u32 %s122, 48
          %s125 = sadd.s32 %s123, %s124
          %s126 = smul.addr %s125, 16
          %s127 = scalar_lea.hbm %s4, %s126
          %s128 = sshrl.u32 %s121, 3
          %s129 = sand.u32 %s121, 7
          %s130 = smul.u32 %s128, 48
          %s131 = sadd.s32 %s129, %s130
          %s132 = smul.u32 %s100, 384
          %s133 = sadd.s32 %s131, %s132
          %s134 = scalar_lea.vmem [#allocation2], %s133
          %s135 = scalar_lea.sflag [#allocation5], %s100
          %s137 = sshll.u32 %s134, 4
          %s138 = int_to_ptr.vmem [resolvable:$true] %s137
          %140 = dma.hbm_to_vmem [thread:$0]  %s127, 96, %s138, %s135, 128, 128, 1
        $region55: #{tpu_custom_call.1} parent=47 // loop_footer
          %s117 = sadd.s32 1, %s113
        $region56: #{tpu_custom_call.1} parent=47 // loop_footer_branch
          %112 = sbr.rel target = $region52
        $region57: #{tpu_custom_call.1} parent=47 // loop_exit
          _
      $region48: #{tpu_custom_call.1} parent=42 // loop_footer
        %s106 = sadd.s32 1, %s102
      $region49: #{tpu_custom_call.1} parent=42 // loop_footer_branch
        %101 = sbr.rel target = $region45
      $region50: #{tpu_custom_call.1} parent=42 // loop_exit
        _
    $region43: #{tpu_custom_call.1} parent=1 // pred_fallthru
      _
    %s141 = smul.u32 %s47, 48
    %s142 = smul.addr %s141, 8
    %s143 = scalar_lea.vmem [#allocation2], %s142
    %s144 = scalar_lea.sflag [#allocation5], %s47
    %s145 = smul.u32 8, 8
    %s146 = smul.u32 %s145, 6
    %s147 = sshll.u32 %s146, 4
    %148 = dma.done %s144, %s147
    %v149 = vld [vmem:[%s143] sm:$0xff]
    %v150 = vld [vmem:[%s143 + $0x8] sm:$0xff]
    %v151 = vld [vmem:[%s143 + $0x10] sm:$0xff]
    %v152 = vld [vmem:[%s143 + $0x18] sm:$0xff]
    %v153 = vld [vmem:[%s143 + $0x20] sm:$0xff]
    %v154 = vld [vmem:[%s143 + $0x28] sm:$0xff]
    %v155 = vld [vmem:[%s143 + $0x30] sm:$0xff]
    %v156 = vld [vmem:[%s143 + $0x38] sm:$0xff]
    %v157 = vld [vmem:[%s143 + $0x40] sm:$0xff]
    %v158 = vld [vmem:[%s143 + $0x48] sm:$0xff]
    %v159 = vld [vmem:[%s143 + $0x50] sm:$0xff]
    %v160 = vld [vmem:[%s143 + $0x58] sm:$0xff]
    %v161 = vld [vmem:[%s143 + $0x60] sm:$0xff]
    %v162 = vld [vmem:[%s143 + $0x68] sm:$0xff]
    %v163 = vld [vmem:[%s143 + $0x70] sm:$0xff]
    %v164 = vld [vmem:[%s143 + $0x78] sm:$0xff]
    %v165 = vld [vmem:[%s143 + $0x80] sm:$0xff]
    %v166 = vld [vmem:[%s143 + $0x88] sm:$0xff]
    %v167 = vld [vmem:[%s143 + $0x90] sm:$0xff]
    %v168 = vld [vmem:[%s143 + $0x98] sm:$0xff]
    %v169 = vld [vmem:[%s143 + $0xa0] sm:$0xff]
    %v170 = vld [vmem:[%s143 + $0xa8] sm:$0xff]
    %v171 = vld [vmem:[%s143 + $0xb0] sm:$0xff]
    %v172 = vld [vmem:[%s143 + $0xb8] sm:$0xff]
    %v173 = vld [vmem:[%s143 + $0xc0] sm:$0xff]
    %v174 = vld [vmem:[%s143 + $0xc8] sm:$0xff]
    %v175 = vld [vmem:[%s143 + $0xd0] sm:$0xff]
    %v176 = vld [vmem:[%s143 + $0xd8] sm:$0xff]
    %v177 = vld [vmem:[%s143 + $0xe0] sm:$0xff]
    %v178 = vld [vmem:[%s143 + $0xe8] sm:$0xff]
    %v179 = vld [vmem:[%s143 + $0xf0] sm:$0xff]
    %v180 = vld [vmem:[%s143 + $0xf8] sm:$0xff]
    %v181 = vld [vmem:[%s143 + $0x100] sm:$0xff]
    %v182 = vld [vmem:[%s143 + $0x108] sm:$0xff]
    %v183 = vld [vmem:[%s143 + $0x110] sm:$0xff]
    %v184 = vld [vmem:[%s143 + $0x118] sm:$0xff]
    %v185 = vld [vmem:[%s143 + $0x120] sm:$0xff]
    %v186 = vld [vmem:[%s143 + $0x128] sm:$0xff]
    %v187 = vld [vmem:[%s143 + $0x130] sm:$0xff]
    %v188 = vld [vmem:[%s143 + $0x138] sm:$0xff]
    %v189 = vld [vmem:[%s143 + $0x140] sm:$0xff]
    %v190 = vld [vmem:[%s143 + $0x148] sm:$0xff]
    %v191 = vld [vmem:[%s143 + $0x150] sm:$0xff]
    %v192 = vld [vmem:[%s143 + $0x158] sm:$0xff]
    %v193 = vld [vmem:[%s143 + $0x160] sm:$0xff]
    %v194 = vld [vmem:[%s143 + $0x168] sm:$0xff]
    %v195 = vld [vmem:[%s143 + $0x170] sm:$0xff]
    %v196 = vld [vmem:[%s143 + $0x178] sm:$0xff]
    %v197 = vld [vmem:[%s1] sm:$0xff]
    %v198 = vld [vmem:[%s1 + $0x8] sm:$0xff]
    %v199 = vld [vmem:[%s1 + $0x10] sm:$0xff]
    %v200 = vld [vmem:[%s1 + $0x18] sm:$0xff]
    %v201 = vld [vmem:[%s1 + $0x20] sm:$0xff]
    %v202 = vld [vmem:[%s1 + $0x28] sm:$0xff]
    %v203 = vld [vmem:[%s1 + $0x30] sm:$0xff]
    %v204 = vld [vmem:[%s1 + $0x38] sm:$0xff]
    %v205 = vld [vmem:[#allocation3] sm:$0xff]
    %v206 = vld [vmem:[#allocation3 + $0x8] sm:$0xff]
    %v207 = vld [vmem:[#allocation3 + $0x10] sm:$0xff]
    %v208 = vld [vmem:[#allocation3 + $0x18] sm:$0xff]
    %v209 = vld [vmem:[#allocation3 + $0x20] sm:$0xff]
    %v210 = vld [vmem:[#allocation3 + $0x28] sm:$0xff]
    %212 = vset.pattern.permute.xlu0 0
    %213 = vperm.xlu0 %212, %v197
    %v214 = vpop.permute.xlu0 %213
    %217 = vset.pattern.permute.xlu0 0
    %218 = vperm.xlu0 %217, %v198
    %v219 = vpop.permute.xlu0 %218
    %222 = vset.pattern.permute.xlu0 0
    %223 = vperm.xlu0 %222, %v199
    %v224 = vpop.permute.xlu0 %223
    %227 = vset.pattern.permute.xlu0 0
    %228 = vperm.xlu0 %227, %v200
    %v229 = vpop.permute.xlu0 %228
    %232 = vset.pattern.permute.xlu0 0
    %233 = vperm.xlu0 %232, %v201
    %v234 = vpop.permute.xlu0 %233
    %237 = vset.pattern.permute.xlu0 0
    %238 = vperm.xlu0 %237, %v202
    %v239 = vpop.permute.xlu0 %238
    %242 = vset.pattern.permute.xlu0 0
    %243 = vperm.xlu0 %242, %v203
    %v244 = vpop.permute.xlu0 %243
    %247 = vset.pattern.permute.xlu0 0
    %248 = vperm.xlu0 %247, %v204
    %v249 = vpop.permute.xlu0 %248
    %v251 = vmul.f32 %v149, %v214
    %v252 = vmul.f32 %v150, %v214
    %v253 = vmul.f32 %v151, %v214
    %v254 = vmul.f32 %v152, %v214
    %v255 = vmul.f32 %v153, %v214
    %v256 = vmul.f32 %v154, %v214
    %v257 = vmul.f32 %v155, %v219
    %v258 = vmul.f32 %v156, %v219
    %v259 = vmul.f32 %v157, %v219
    %v260 = vmul.f32 %v158, %v219
    %v261 = vmul.f32 %v159, %v219
    %v262 = vmul.f32 %v160, %v219
    %v263 = vmul.f32 %v161, %v224
    %v264 = vmul.f32 %v162, %v224
    %v265 = vmul.f32 %v163, %v224
    %v266 = vmul.f32 %v164, %v224
    %v267 = vmul.f32 %v165, %v224
    %v268 = vmul.f32 %v166, %v224
    %v269 = vmul.f32 %v167, %v229
    %v270 = vmul.f32 %v168, %v229
    %v271 = vmul.f32 %v169, %v229
    %v272 = vmul.f32 %v170, %v229
    %v273 = vmul.f32 %v171, %v229
    %v274 = vmul.f32 %v172, %v229
    %v275 = vmul.f32 %v173, %v234
    %v276 = vmul.f32 %v174, %v234
    %v277 = vmul.f32 %v175, %v234
    %v278 = vmul.f32 %v176, %v234
    %v279 = vmul.f32 %v177, %v234
    %v280 = vmul.f32 %v178, %v234
    %v281 = vmul.f32 %v179, %v239
    %v282 = vmul.f32 %v180, %v239
    %v283 = vmul.f32 %v181, %v239
    %v284 = vmul.f32 %v182, %v239
    %v285 = vmul.f32 %v183, %v239
    %v286 = vmul.f32 %v184, %v239
    %v287 = vmul.f32 %v185, %v244
    %v288 = vmul.f32 %v186, %v244
    %v289 = vmul.f32 %v187, %v244
    %v290 = vmul.f32 %v188, %v244
    %v291 = vmul.f32 %v189, %v244
    %v292 = vmul.f32 %v190, %v244
    %v293 = vmul.f32 %v191, %v249
    %v294 = vmul.f32 %v192, %v249
    %v295 = vmul.f32 %v193, %v249
    %v296 = vmul.f32 %v194, %v249
    %v297 = vmul.f32 %v195, %v249
    %v298 = vmul.f32 %v196, %v249
    %v299 = vrot.slane %v251, 4
    %v300 = vadd.f32 %v251, %v299
    %v301 = vrot.slane %v300, 2
    %v302 = vadd.f32 %v300, %v301
    %v303 = vrot.slane %v302, 1
    %v304 = vadd.f32 %v302, %v303
    %v305 = vrot.slane %v252, 4
    %v306 = vadd.f32 %v252, %v305
    %v307 = vrot.slane %v306, 2
    %v308 = vadd.f32 %v306, %v307
    %v309 = vrot.slane %v308, 1
    %v310 = vadd.f32 %v308, %v309
    %v311 = vrot.slane %v253, 4
    %v312 = vadd.f32 %v253, %v311
    %v313 = vrot.slane %v312, 2
    %v314 = vadd.f32 %v312, %v313
    %v315 = vrot.slane %v314, 1
    %v316 = vadd.f32 %v314, %v315
    %v317 = vrot.slane %v254, 4
    %v318 = vadd.f32 %v254, %v317
    %v319 = vrot.slane %v318, 2
    %v320 = vadd.f32 %v318, %v319
    %v321 = vrot.slane %v320, 1
    %v322 = vadd.f32 %v320, %v321
    %v323 = vrot.slane %v255, 4
    %v324 = vadd.f32 %v255, %v323
    %v325 = vrot.slane %v324, 2
    %v326 = vadd.f32 %v324, %v325
    %v327 = vrot.slane %v326, 1
    %v328 = vadd.f32 %v326, %v327
    %v329 = vrot.slane %v256, 4
    %v330 = vadd.f32 %v256, %v329
    %v331 = vrot.slane %v330, 2
    %v332 = vadd.f32 %v330, %v331
    %v333 = vrot.slane %v332, 1
    %v334 = vadd.f32 %v332, %v333
    %v335 = vrot.slane %v257, 4
    %v336 = vadd.f32 %v257, %v335
    %v337 = vrot.slane %v336, 2
    %v338 = vadd.f32 %v336, %v337
    %v339 = vrot.slane %v338, 1
    %v340 = vadd.f32 %v338, %v339
    %v341 = vrot.slane %v258, 4
    %v342 = vadd.f32 %v258, %v341
    %v343 = vrot.slane %v342, 2
    %v344 = vadd.f32 %v342, %v343
    %v345 = vrot.slane %v344, 1
    %v346 = vadd.f32 %v344, %v345
    %v347 = vrot.slane %v259, 4
    %v348 = vadd.f32 %v259, %v347
    %v349 = vrot.slane %v348, 2
    %v350 = vadd.f32 %v348, %v349
    %v351 = vrot.slane %v350, 1
    %v352 = vadd.f32 %v350, %v351
    %v353 = vrot.slane %v260, 4
    %v354 = vadd.f32 %v260, %v353
    %v355 = vrot.slane %v354, 2
    %v356 = vadd.f32 %v354, %v355
    %v357 = vrot.slane %v356, 1
    %v358 = vadd.f32 %v356, %v357
    %v359 = vrot.slane %v261, 4
    %v360 = vadd.f32 %v261, %v359
    %v361 = vrot.slane %v360, 2
    %v362 = vadd.f32 %v360, %v361
    %v363 = vrot.slane %v362, 1
    %v364 = vadd.f32 %v362, %v363
    %v365 = vrot.slane %v262, 4
    %v366 = vadd.f32 %v262, %v365
    %v367 = vrot.slane %v366, 2
    %v368 = vadd.f32 %v366, %v367
    %v369 = vrot.slane %v368, 1
    %v370 = vadd.f32 %v368, %v369
    %v371 = vrot.slane %v263, 4
    %v372 = vadd.f32 %v263, %v371
    %v373 = vrot.slane %v372, 2
    %v374 = vadd.f32 %v372, %v373
    %v375 = vrot.slane %v374, 1
    %v376 = vadd.f32 %v374, %v375
    %v377 = vrot.slane %v264, 4
    %v378 = vadd.f32 %v264, %v377
    %v379 = vrot.slane %v378, 2
    %v380 = vadd.f32 %v378, %v379
    %v381 = vrot.slane %v380, 1
    %v382 = vadd.f32 %v380, %v381
    %v383 = vrot.slane %v265, 4
    %v384 = vadd.f32 %v265, %v383
    %v385 = vrot.slane %v384, 2
    %v386 = vadd.f32 %v384, %v385
    %v387 = vrot.slane %v386, 1
    %v388 = vadd.f32 %v386, %v387
    %v389 = vrot.slane %v266, 4
    %v390 = vadd.f32 %v266, %v389
    %v391 = vrot.slane %v390, 2
    %v392 = vadd.f32 %v390, %v391
    %v393 = vrot.slane %v392, 1
    %v394 = vadd.f32 %v392, %v393
    %v395 = vrot.slane %v267, 4
    %v396 = vadd.f32 %v267, %v395
    %v397 = vrot.slane %v396, 2
    %v398 = vadd.f32 %v396, %v397
    %v399 = vrot.slane %v398, 1
    %v400 = vadd.f32 %v398, %v399
    %v401 = vrot.slane %v268, 4
    %v402 = vadd.f32 %v268, %v401
    %v403 = vrot.slane %v402, 2
    %v404 = vadd.f32 %v402, %v403
    %v405 = vrot.slane %v404, 1
    %v406 = vadd.f32 %v404, %v405
    %v407 = vrot.slane %v269, 4
    %v408 = vadd.f32 %v269, %v407
    %v409 = vrot.slane %v408, 2
    %v410 = vadd.f32 %v408, %v409
    %v411 = vrot.slane %v410, 1
    %v412 = vadd.f32 %v410, %v411
    %v413 = vrot.slane %v270, 4
    %v414 = vadd.f32 %v270, %v413
    %v415 = vrot.slane %v414, 2
    %v416 = vadd.f32 %v414, %v415
    %v417 = vrot.slane %v416, 1
    %v418 = vadd.f32 %v416, %v417
    %v419 = vrot.slane %v271, 4
    %v420 = vadd.f32 %v271, %v419
    %v421 = vrot.slane %v420, 2
    %v422 = vadd.f32 %v420, %v421
    %v423 = vrot.slane %v422, 1
    %v424 = vadd.f32 %v422, %v423
    %v425 = vrot.slane %v272, 4
    %v426 = vadd.f32 %v272, %v425
    %v427 = vrot.slane %v426, 2
    %v428 = vadd.f32 %v426, %v427
    %v429 = vrot.slane %v428, 1
    %v430 = vadd.f32 %v428, %v429
    %v431 = vrot.slane %v273, 4
    %v432 = vadd.f32 %v273, %v431
    %v433 = vrot.slane %v432, 2
    %v434 = vadd.f32 %v432, %v433
    %v435 = vrot.slane %v434, 1
    %v436 = vadd.f32 %v434, %v435
    %v437 = vrot.slane %v274, 4
    %v438 = vadd.f32 %v274, %v437
    %v439 = vrot.slane %v438, 2
    %v440 = vadd.f32 %v438, %v439
    %v441 = vrot.slane %v440, 1
    %v442 = vadd.f32 %v440, %v441
    %v443 = vrot.slane %v275, 4
    %v444 = vadd.f32 %v275, %v443
    %v445 = vrot.slane %v444, 2
    %v446 = vadd.f32 %v444, %v445
    %v447 = vrot.slane %v446, 1
    %v448 = vadd.f32 %v446, %v447
    %v449 = vrot.slane %v276, 4
    %v450 = vadd.f32 %v276, %v449
    %v451 = vrot.slane %v450, 2
    %v452 = vadd.f32 %v450, %v451
    %v453 = vrot.slane %v452, 1
    %v454 = vadd.f32 %v452, %v453
    %v455 = vrot.slane %v277, 4
    %v456 = vadd.f32 %v277, %v455
    %v457 = vrot.slane %v456, 2
    %v458 = vadd.f32 %v456, %v457
    %v459 = vrot.slane %v458, 1
    %v460 = vadd.f32 %v458, %v459
    %v461 = vrot.slane %v278, 4
    %v462 = vadd.f32 %v278, %v461
    %v463 = vrot.slane %v462, 2
    %v464 = vadd.f32 %v462, %v463
    %v465 = vrot.slane %v464, 1
    %v466 = vadd.f32 %v464, %v465
    %v467 = vrot.slane %v279, 4
    %v468 = vadd.f32 %v279, %v467
    %v469 = vrot.slane %v468, 2
    %v470 = vadd.f32 %v468, %v469
    %v471 = vrot.slane %v470, 1
    %v472 = vadd.f32 %v470, %v471
    %v473 = vrot.slane %v280, 4
    %v474 = vadd.f32 %v280, %v473
    %v475 = vrot.slane %v474, 2
    %v476 = vadd.f32 %v474, %v475
    %v477 = vrot.slane %v476, 1
    %v478 = vadd.f32 %v476, %v477
    %v479 = vrot.slane %v281, 4
    %v480 = vadd.f32 %v281, %v479
    %v481 = vrot.slane %v480, 2
    %v482 = vadd.f32 %v480, %v481
    %v483 = vrot.slane %v482, 1
    %v484 = vadd.f32 %v482, %v483
    %v485 = vrot.slane %v282, 4
    %v486 = vadd.f32 %v282, %v485
    %v487 = vrot.slane %v486, 2
    %v488 = vadd.f32 %v486, %v487
    %v489 = vrot.slane %v488, 1
    %v490 = vadd.f32 %v488, %v489
    %v491 = vrot.slane %v283, 4
    %v492 = vadd.f32 %v283, %v491
    %v493 = vrot.slane %v492, 2
    %v494 = vadd.f32 %v492, %v493
    %v495 = vrot.slane %v494, 1
    %v496 = vadd.f32 %v494, %v495
    %v497 = vrot.slane %v284, 4
    %v498 = vadd.f32 %v284, %v497
    %v499 = vrot.slane %v498, 2
    %v500 = vadd.f32 %v498, %v499
    %v501 = vrot.slane %v500, 1
    %v502 = vadd.f32 %v500, %v501
    %v503 = vrot.slane %v285, 4
    %v504 = vadd.f32 %v285, %v503
    %v505 = vrot.slane %v504, 2
    %v506 = vadd.f32 %v504, %v505
    %v507 = vrot.slane %v506, 1
    %v508 = vadd.f32 %v506, %v507
    %v509 = vrot.slane %v286, 4
    %v510 = vadd.f32 %v286, %v509
    %v511 = vrot.slane %v510, 2
    %v512 = vadd.f32 %v510, %v511
    %v513 = vrot.slane %v512, 1
    %v514 = vadd.f32 %v512, %v513
    %v515 = vrot.slane %v287, 4
    %v516 = vadd.f32 %v287, %v515
    %v517 = vrot.slane %v516, 2
    %v518 = vadd.f32 %v516, %v517
    %v519 = vrot.slane %v518, 1
    %v520 = vadd.f32 %v518, %v519
    %v521 = vrot.slane %v288, 4
    %v522 = vadd.f32 %v288, %v521
    %v523 = vrot.slane %v522, 2
    %v524 = vadd.f32 %v522, %v523
    %v525 = vrot.slane %v524, 1
    %v526 = vadd.f32 %v524, %v525
    %v527 = vrot.slane %v289, 4
    %v528 = vadd.f32 %v289, %v527
    %v529 = vrot.slane %v528, 2
    %v530 = vadd.f32 %v528, %v529
    %v531 = vrot.slane %v530, 1
    %v532 = vadd.f32 %v530, %v531
    %v533 = vrot.slane %v290, 4
    %v534 = vadd.f32 %v290, %v533
    %v535 = vrot.slane %v534, 2
    %v536 = vadd.f32 %v534, %v535
    %v537 = vrot.slane %v536, 1
    %v538 = vadd.f32 %v536, %v537
    %v539 = vrot.slane %v291, 4
    %v540 = vadd.f32 %v291, %v539
    %v541 = vrot.slane %v540, 2
    %v542 = vadd.f32 %v540, %v541
    %v543 = vrot.slane %v542, 1
    %v544 = vadd.f32 %v542, %v543
    %v545 = vrot.slane %v292, 4
    %v546 = vadd.f32 %v292, %v545
    %v547 = vrot.slane %v546, 2
    %v548 = vadd.f32 %v546, %v547
    %v549 = vrot.slane %v548, 1
    %v550 = vadd.f32 %v548, %v549
    %v551 = vrot.slane %v293, 4
    %v552 = vadd.f32 %v293, %v551
    %v553 = vrot.slane %v552, 2
    %v554 = vadd.f32 %v552, %v553
    %v555 = vrot.slane %v554, 1
    %v556 = vadd.f32 %v554, %v555
    %v557 = vrot.slane %v294, 4
    %v558 = vadd.f32 %v294, %v557
    %v559 = vrot.slane %v558, 2
    %v560 = vadd.f32 %v558, %v559
    %v561 = vrot.slane %v560, 1
    %v562 = vadd.f32 %v560, %v561
    %v563 = vrot.slane %v295, 4
    %v564 = vadd.f32 %v295, %v563
    %v565 = vrot.slane %v564, 2
    %v566 = vadd.f32 %v564, %v565
    %v567 = vrot.slane %v566, 1
    %v568 = vadd.f32 %v566, %v567
    %v569 = vrot.slane %v296, 4
    %v570 = vadd.f32 %v296, %v569
    %v571 = vrot.slane %v570, 2
    %v572 = vadd.f32 %v570, %v571
    %v573 = vrot.slane %v572, 1
    %v574 = vadd.f32 %v572, %v573
    %v575 = vrot.slane %v297, 4
    %v576 = vadd.f32 %v297, %v575
    %v577 = vrot.slane %v576, 2
    %v578 = vadd.f32 %v576, %v577
    %v579 = vrot.slane %v578, 1
    %v580 = vadd.f32 %v578, %v579
    %v581 = vrot.slane %v298, 4
    %v582 = vadd.f32 %v298, %v581
    %v583 = vrot.slane %v582, 2
    %v584 = vadd.f32 %v582, %v583
    %v585 = vrot.slane %v584, 1
    %v586 = vadd.f32 %v584, %v585
    %vm635 = vcmask 1041409
    %v636 = vsel %vm635, %v340, %v304
    %vm637 = vcmask 1042434
    %v638 = vsel %vm637, %v376, %v636
    %vm639 = vcmask 1043459
    %v640 = vsel %vm639, %v412, %v638
    %vm641 = vcmask 1044484
    %v642 = vsel %vm641, %v448, %v640
    %vm643 = vcmask 1045509
    %v644 = vsel %vm643, %v484, %v642
    %vm645 = vcmask 1046534
    %v646 = vsel %vm645, %v520, %v644
    %vm647 = vcmask 1047559
    %v648 = vsel %vm647, %v556, %v646
    %v649 = vsel %vm635, %v346, %v310
    %v650 = vsel %vm637, %v382, %v649
    %v651 = vsel %vm639, %v418, %v650
    %v652 = vsel %vm641, %v454, %v651
    %v653 = vsel %vm643, %v490, %v652
    %v654 = vsel %vm645, %v526, %v653
    %v655 = vsel %vm647, %v562, %v654
    %v656 = vsel %vm635, %v352, %v316
    %v657 = vsel %vm637, %v388, %v656
    %v658 = vsel %vm639, %v424, %v657
    %v659 = vsel %vm641, %v460, %v658
    %v660 = vsel %vm643, %v496, %v659
    %v661 = vsel %vm645, %v532, %v660
    %v662 = vsel %vm647, %v568, %v661
    %v663 = vsel %vm635, %v358, %v322
    %v664 = vsel %vm637, %v394, %v663
    %v665 = vsel %vm639, %v430, %v664
    %v666 = vsel %vm641, %v466, %v665
    %v667 = vsel %vm643, %v502, %v666
    %v668 = vsel %vm645, %v538, %v667
    %v669 = vsel %vm647, %v574, %v668
    %v670 = vsel %vm635, %v364, %v328
    %v671 = vsel %vm637, %v400, %v670
    %v672 = vsel %vm639, %v436, %v671
    %v673 = vsel %vm641, %v472, %v672
    %v674 = vsel %vm643, %v508, %v673
    %v675 = vsel %vm645, %v544, %v674
    %v676 = vsel %vm647, %v580, %v675
    %v677 = vsel %vm635, %v370, %v334
    %v678 = vsel %vm637, %v406, %v677
    %v679 = vsel %vm639, %v442, %v678
    %v680 = vsel %vm641, %v478, %v679
    %v681 = vsel %vm643, %v514, %v680
    %v682 = vsel %vm645, %v550, %v681
    %v683 = vsel %vm647, %v586, %v682
    %v690 = vadd.f32 %v205, %v648
    %v691 = vadd.f32 %v206, %v655
    %v692 = vadd.f32 %v207, %v662
    %v693 = vadd.f32 %v208, %v669
    %v694 = vadd.f32 %v209, %v676
    %v695 = vadd.f32 %v210, %v683
    %696 = vst [vmem:[#allocation3] sm:$0xff] %v690
    %697 = vst [vmem:[#allocation3 + $0x8] sm:$0xff] %v691
    %698 = vst [vmem:[#allocation3 + $0x10] sm:$0xff] %v692
    %699 = vst [vmem:[#allocation3 + $0x18] sm:$0xff] %v693
    %700 = vst [vmem:[#allocation3 + $0x20] sm:$0xff] %v694
    %701 = vst [vmem:[#allocation3 + $0x28] sm:$0xff] %v695
    %v702 = vld [vmem:[#allocation4] sm:$0xff]
    %vm703 = vcmask 7168
    %v704 = vsel %vm703, %v197, 0.0
    %v705 = vrot.slane %v704, 4
    %v706 = vadd.f32 %v704, %v705
    %v707 = vrot.slane %v706, 2
    %v708 = vadd.f32 %v706, %v707
    %v709 = vrot.slane %v708, 1
    %v710 = vadd.f32 %v708, %v709
    %v711 = vsel %vm703, %v198, 0.0
    %v712 = vrot.slane %v711, 4
    %v713 = vadd.f32 %v711, %v712
    %v714 = vrot.slane %v713, 2
    %v715 = vadd.f32 %v713, %v714
    %v716 = vrot.slane %v715, 1
    %v717 = vadd.f32 %v715, %v716
    %v718 = vsel %vm703, %v199, 0.0
    %v719 = vrot.slane %v718, 4
    %v720 = vadd.f32 %v718, %v719
    %v721 = vrot.slane %v720, 2
    %v722 = vadd.f32 %v720, %v721
    %v723 = vrot.slane %v722, 1
    %v724 = vadd.f32 %v722, %v723
    %v725 = vsel %vm703, %v200, 0.0
    %v726 = vrot.slane %v725, 4
    %v727 = vadd.f32 %v725, %v726
    %v728 = vrot.slane %v727, 2
    %v729 = vadd.f32 %v727, %v728
    %v730 = vrot.slane %v729, 1
    %v731 = vadd.f32 %v729, %v730
    %v732 = vsel %vm703, %v201, 0.0
    %v733 = vrot.slane %v732, 4
    %v734 = vadd.f32 %v732, %v733
    %v735 = vrot.slane %v734, 2
    %v736 = vadd.f32 %v734, %v735
    %v737 = vrot.slane %v736, 1
    %v738 = vadd.f32 %v736, %v737
    %v739 = vsel %vm703, %v202, 0.0
    %v740 = vrot.slane %v739, 4
    %v741 = vadd.f32 %v739, %v740
    %v742 = vrot.slane %v741, 2
    %v743 = vadd.f32 %v741, %v742
    %v744 = vrot.slane %v743, 1
    %v745 = vadd.f32 %v743, %v744
    %v746 = vsel %vm703, %v203, 0.0
    %v747 = vrot.slane %v746, 4
    %v748 = vadd.f32 %v746, %v747
    %v749 = vrot.slane %v748, 2
    %v750 = vadd.f32 %v748, %v749
    %v751 = vrot.slane %v750, 1
    %v752 = vadd.f32 %v750, %v751
    %v753 = vsel %vm703, %v204, 0.0
    %v754 = vrot.slane %v753, 4
    %v755 = vadd.f32 %v753, %v754
    %v756 = vrot.slane %v755, 2
    %v757 = vadd.f32 %v755, %v756
    %v758 = vrot.slane %v757, 1
    %v759 = vadd.f32 %v757, %v758
    %v768 = vsel %vm635, %v717, %v710
    %v769 = vsel %vm637, %v724, %v768
    %v770 = vsel %vm639, %v731, %v769
    %v771 = vsel %vm641, %v738, %v770
    %v772 = vsel %vm643, %v745, %v771
    %v773 = vsel %vm645, %v752, %v772
    %v774 = vsel %vm647, %v759, %v773
    %v776 = vadd.f32 %v702, %v774
    %777 = vst.msk [vmem:[#allocation4] sm:$0xff] %vm703, %v776
    // Predicated region
    $region58: #{tpu_custom_call.1} parent=1 // pred_check
      %p778 = pneg %p48
    $region59: #{tpu_custom_call.1} parent=1 // pred_check_branch
      %780 = sbr.rel (%p778) target = $region61
    $region60: #{tpu_custom_call.1} parent=1 // pred_region
      %v781 = vld [vmem:[#allocation4] sm:$0xff]
      %v782 = vmax.f32 %v781, 1e-09
      %v783 = vld [vmem:[#allocation3] sm:$0xff]
      %v784 = vld [vmem:[#allocation3 + $0x8] sm:$0xff]
      %v785 = vld [vmem:[#allocation3 + $0x10] sm:$0xff]
      %v786 = vld [vmem:[#allocation3 + $0x18] sm:$0xff]
      %v787 = vld [vmem:[#allocation3 + $0x20] sm:$0xff]
      %v788 = vld [vmem:[#allocation3 + $0x28] sm:$0xff]
      %v789 = vrcp.pop %v782
      %791 = vset.pattern.permute.xlu0 0
      %792 = vperm.xlu0 %791, %v789
      %v793 = vpop.permute.xlu0 %792
      %v795 = vmul.f32 %v783, %v793
      %v796 = vmul.f32 %v784, %v793
      %v797 = vmul.f32 %v785, %v793
      %v798 = vmul.f32 %v786, %v793
      %v799 = vmul.f32 %v787, %v793
      %v800 = vmul.f32 %v788, %v793
      %v801 = vld [vmem:[#allocation8] sm:$0xff]
      %v802 = vld [vmem:[#allocation8 + $0x8] sm:$0xff]
      %v803 = vld [vmem:[#allocation8 + $0x10] sm:$0xff]
      %v804 = vld [vmem:[#allocation8 + $0x18] sm:$0xff]
      %v805 = vld [vmem:[#allocation8 + $0x20] sm:$0xff]
      %v806 = vld [vmem:[#allocation8 + $0x28] sm:$0xff]
      %v807 = vld [vmem:[#allocation8 + $0x30] sm:$0xff]
      %v808 = vld [vmem:[#allocation8 + $0x38] sm:$0xff]
      %v809 = vld [vmem:[#allocation8 + $0x40] sm:$0xff]
      %v810 = vld [vmem:[#allocation8 + $0x48] sm:$0xff]
      %v811 = vld [vmem:[#allocation8 + $0x50] sm:$0xff]
      %v812 = vld [vmem:[#allocation8 + $0x58] sm:$0xff]
      %v813 = vld [vmem:[#allocation8 + $0x60] sm:$0xff]
      %v814 = vld [vmem:[#allocation8 + $0x68] sm:$0xff]
      %v815 = vld [vmem:[#allocation8 + $0x70] sm:$0xff]
      %v816 = vld [vmem:[#allocation8 + $0x78] sm:$0xff]
      %v817 = vld [vmem:[#allocation8 + $0x80] sm:$0xff]
      %v818 = vld [vmem:[#allocation8 + $0x88] sm:$0xff]
      %v819 = vld [vmem:[#allocation8 + $0x90] sm:$0xff]
      %v820 = vld [vmem:[#allocation8 + $0x98] sm:$0xff]
      %v821 = vld [vmem:[#allocation8 + $0xa0] sm:$0xff]
      %v822 = vld [vmem:[#allocation8 + $0xa8] sm:$0xff]
      %v823 = vld [vmem:[#allocation8 + $0xb0] sm:$0xff]
      %v824 = vld [vmem:[#allocation8 + $0xb8] sm:$0xff]
      %v825 = vld [vmem:[#allocation8 + $0xc0] sm:$0xff]
      %v826 = vld [vmem:[#allocation8 + $0xc8] sm:$0xff]
      %v827 = vld [vmem:[#allocation8 + $0xd0] sm:$0xff]
      %v828 = vld [vmem:[#allocation8 + $0xd8] sm:$0xff]
      %v829 = vld [vmem:[#allocation8 + $0xe0] sm:$0xff]
      %v830 = vld [vmem:[#allocation8 + $0xe8] sm:$0xff]
      %v831 = vld [vmem:[#allocation8 + $0xf0] sm:$0xff]
      %v832 = vld [vmem:[#allocation8 + $0xf8] sm:$0xff]
      %v833 = vld [vmem:[#allocation8 + $0x100] sm:$0xff]
      %v834 = vld [vmem:[#allocation8 + $0x108] sm:$0xff]
      %v835 = vld [vmem:[#allocation8 + $0x110] sm:$0xff]
      %v836 = vld [vmem:[#allocation8 + $0x118] sm:$0xff]
      %v837 = vld [vmem:[#allocation8 + $0x120] sm:$0xff]
      %v838 = vld [vmem:[#allocation8 + $0x128] sm:$0xff]
      %v839 = vld [vmem:[#allocation8 + $0x130] sm:$0xff]
      %v840 = vld [vmem:[#allocation8 + $0x138] sm:$0xff]
      %v841 = vld [vmem:[#allocation8 + $0x140] sm:$0xff]
      %v842 = vld [vmem:[#allocation8 + $0x148] sm:$0xff]
      %v843 = vld [vmem:[#allocation8 + $0x150] sm:$0xff]
      %v844 = vld [vmem:[#allocation8 + $0x158] sm:$0xff]
      %v845 = vld [vmem:[#allocation8 + $0x160] sm:$0xff]
      %v846 = vld [vmem:[#allocation8 + $0x168] sm:$0xff]
      %v847 = vld [vmem:[#allocation8 + $0x170] sm:$0xff]
      %v848 = vld [vmem:[#allocation8 + $0x178] sm:$0xff]
      %v849 = vld [vmem:[#allocation8 + $0x180] sm:$0xff]
      %v850 = vld [vmem:[#allocation8 + $0x188] sm:$0xff]
      %v851 = vld [vmem:[#allocation8 + $0x190] sm:$0xff]
      %v852 = vld [vmem:[#allocation8 + $0x198] sm:$0xff]
      %v853 = vld [vmem:[#allocation8 + $0x1a0] sm:$0xff]
      %v854 = vld [vmem:[#allocation8 + $0x1a8] sm:$0xff]
      %v855 = vld [vmem:[#allocation8 + $0x1b0] sm:$0xff]
      %v856 = vld [vmem:[#allocation8 + $0x1b8] sm:$0xff]
      %v857 = vld [vmem:[#allocation8 + $0x1c0] sm:$0xff]
      %v858 = vld [vmem:[#allocation8 + $0x1c8] sm:$0xff]
      %v859 = vld [vmem:[#allocation8 + $0x1d0] sm:$0xff]
      %v860 = vld [vmem:[#allocation8 + $0x1d8] sm:$0xff]
      %v861 = vld [vmem:[#allocation8 + $0x1e0] sm:$0xff]
      %v862 = vld [vmem:[#allocation8 + $0x1e8] sm:$0xff]
      %v863 = vld [vmem:[#allocation8 + $0x1f0] sm:$0xff]
      %v864 = vld [vmem:[#allocation8 + $0x1f8] sm:$0xff]
      %v865 = vld [vmem:[#allocation8 + $0x200] sm:$0xff]
      %v866 = vld [vmem:[#allocation8 + $0x208] sm:$0xff]
      %v867 = vld [vmem:[#allocation8 + $0x210] sm:$0xff]
      %v868 = vld [vmem:[#allocation8 + $0x218] sm:$0xff]
      %v869 = vld [vmem:[#allocation8 + $0x220] sm:$0xff]
      %v870 = vld [vmem:[#allocation8 + $0x228] sm:$0xff]
      %v871 = vld [vmem:[#allocation8 + $0x230] sm:$0xff]
      %v872 = vld [vmem:[#allocation8 + $0x238] sm:$0xff]
      %v873 = vld [vmem:[#allocation8 + $0x240] sm:$0xff]
      %v874 = vld [vmem:[#allocation8 + $0x248] sm:$0xff]
      %v875 = vld [vmem:[#allocation8 + $0x250] sm:$0xff]
      %v876 = vld [vmem:[#allocation8 + $0x258] sm:$0xff]
      %v877 = vld [vmem:[#allocation8 + $0x260] sm:$0xff]
      %v878 = vld [vmem:[#allocation8 + $0x268] sm:$0xff]
      %v879 = vld [vmem:[#allocation8 + $0x270] sm:$0xff]
      %v880 = vld [vmem:[#allocation8 + $0x278] sm:$0xff]
      %v881 = vld [vmem:[#allocation8 + $0x280] sm:$0xff]
      %v882 = vld [vmem:[#allocation8 + $0x288] sm:$0xff]
      %v883 = vld [vmem:[#allocation8 + $0x290] sm:$0xff]
      %v884 = vld [vmem:[#allocation8 + $0x298] sm:$0xff]
      %v885 = vld [vmem:[#allocation8 + $0x2a0] sm:$0xff]
      %v886 = vld [vmem:[#allocation8 + $0x2a8] sm:$0xff]
      %v887 = vld [vmem:[#allocation8 + $0x2b0] sm:$0xff]
      %v888 = vld [vmem:[#allocation8 + $0x2b8] sm:$0xff]
      %v889 = vld [vmem:[#allocation8 + $0x2c0] sm:$0xff]
      %v890 = vld [vmem:[#allocation8 + $0x2c8] sm:$0xff]
      %v891 = vld [vmem:[#allocation8 + $0x2d0] sm:$0xff]
      %v892 = vld [vmem:[#allocation8 + $0x2d8] sm:$0xff]
      %v893 = vld [vmem:[#allocation8 + $0x2e0] sm:$0xff]
      %v894 = vld [vmem:[#allocation8 + $0x2e8] sm:$0xff]
      %v895 = vld [vmem:[#allocation8 + $0x2f0] sm:$0xff]
      %v896 = vld [vmem:[#allocation8 + $0x2f8] sm:$0xff]
      %v897 = vld [vmem:[#allocation11] sm:$0x1]
      %v899 = vlaneseq
      %v900 = vshrl.u32 %v899, 7
      %v901 = vsub.s32 0, %v900
      %v902 = vrot.slane %v897, %v901
      %904 = vmatprep.subr.mxu0 0.0
      %905 = vmatpush1.msra.mxu0 %v801
      %906 = vmatprep.subr.mxu0 0.0
      %907 = vmatpush1.msra.mxu0 %v802
      %908 = vmatprep.subr.mxu0 0.0
      %909 = vmatpush1.msra.mxu0 %v803
      %910 = vmatprep.subr.mxu0 0.0
      %911 = vmatpush1.msra.mxu0 %v804
      %912 = vmatprep.subr.mxu0 0.0
      %913 = vmatpush1.msra.mxu0 %v805
      %914 = vmatprep.subr.mxu0 0.0
      %915 = vmatpush1.msra.mxu0 %v806
      %916 = vmatprep.subr.mxu0 0.0
      %917 = vmatpush1.msra.mxu0 %v807
      %918 = vmatprep.subr.mxu0 0.0
      %919 = vmatpush1.msra.mxu0 %v808
      %920 = vmatprep.subr.mxu0 0.0
      %921 = vmatpush1.msra.mxu0 %v809
      %922 = vmatprep.subr.mxu0 0.0
      %923 = vmatpush1.msra.mxu0 %v810
      %924 = vmatprep.subr.mxu0 0.0
      %925 = vmatpush1.msra.mxu0 %v811
      %926 = vmatprep.subr.mxu0 0.0
      %927 = vmatpush1.msra.mxu0 %v812
      %928 = vmatprep.subr.mxu0 0.0
      %929 = vmatpush1.msra.mxu0 %v813
      %930 = vmatprep.subr.mxu0 0.0
      %931 = vmatpush1.msra.mxu0 %v814
      %932 = vmatprep.subr.mxu0 0.0
      %933 = vmatpush1.msra.mxu0 %v815
      %934 = vmatprep.subr.mxu0 0.0
      %935 = vmatpush1.msra.mxu0 %v816
      %936 = vmatprep.subr.mxu0 0.0
      %937 = vmatpush1.msra.mxu0 %v817
      %938 = vmatprep.subr.mxu0 0.0
      %939 = vmatpush1.msra.mxu0 %v818
      %940 = vmatprep.subr.mxu0 0.0
      %941 = vmatpush1.msra.mxu0 %v819
      %942 = vmatprep.subr.mxu0 0.0
      %943 = vmatpush1.msra.mxu0 %v820
      %944 = vmatprep.subr.mxu0 0.0
      %945 = vmatpush1.msra.mxu0 %v821
      %946 = vmatprep.subr.mxu0 0.0
      %947 = vmatpush1.msra.mxu0 %v822
      %948 = vmatprep.subr.mxu0 0.0
      %949 = vmatpush1.msra.mxu0 %v823
      %950 = vmatprep.subr.mxu0 0.0
      %951 = vmatpush1.msra.mxu0 %v824
      %952 = vmatprep.subr.mxu0 0.0
      %953 = vmatpush1.msra.mxu0 %v825
      %954 = vmatprep.subr.mxu0 0.0
      %955 = vmatpush1.msra.mxu0 %v826
      %956 = vmatprep.subr.mxu0 0.0
      %957 = vmatpush1.msra.mxu0 %v827
      %958 = vmatprep.subr.mxu0 0.0
      %959 = vmatpush1.msra.mxu0 %v828
      %960 = vmatprep.subr.mxu0 0.0
      %961 = vmatpush1.msra.mxu0 %v829
      %962 = vmatprep.subr.mxu0 0.0
      %963 = vmatpush1.msra.mxu0 %v830
      %964 = vmatprep.subr.mxu0 0.0
      %965 = vmatpush1.msra.mxu0 %v831
      %966 = vmatprep.subr.mxu0 0.0
      %967 = vmatpush1.msra.mxu0 %v832
      %968 = vmatprep.mubr.f32.mxu0 %v796
      %969 = vmatmul.mubr.f32.gmra.mrb[0].mxu0 %v795
      %v970 = vpop.f32.mrb[0].mxu0
      %v971 = vadd.f32 %v902, %v970
      %v972 = vpop.f32.mrb[0].mxu0
      %973 = vdwg.mxu0
      %974 = vmatprep.subr.mxu0 0.0
      %975 = vmatpush1.msra.mxu0 %v833
      %976 = vmatprep.subr.mxu0 0.0
      %977 = vmatpush1.msra.mxu0 %v834
      %978 = vmatprep.subr.mxu0 0.0
      %979 = vmatpush1.msra.mxu0 %v835
      %980 = vmatprep.subr.mxu0 0.0
      %981 = vmatpush1.msra.mxu0 %v836
      %982 = vmatprep.subr.mxu0 0.0
      %983 = vmatpush1.msra.mxu0 %v837
      %984 = vmatprep.subr.mxu0 0.0
      %985 = vmatpush1.msra.mxu0 %v838
      %986 = vmatprep.subr.mxu0 0.0
      %987 = vmatpush1.msra.mxu0 %v839
      %988 = vmatprep.subr.mxu0 0.0
      %989 = vmatpush1.msra.mxu0 %v840
      %990 = vmatprep.subr.mxu0 0.0
      %991 = vmatpush1.msra.mxu0 %v841
      %992 = vmatprep.subr.mxu0 0.0
      %993 = vmatpush1.msra.mxu0 %v842
      %994 = vmatprep.subr.mxu0 0.0
      %995 = vmatpush1.msra.mxu0 %v843
      %996 = vmatprep.subr.mxu0 0.0
      %997 = vmatpush1.msra.mxu0 %v844
      %998 = vmatprep.subr.mxu0 0.0
      %999 = vmatpush1.msra.mxu0 %v845
      %1000 = vmatprep.subr.mxu0 0.0
      %1001 = vmatpush1.msra.mxu0 %v846
      %1002 = vmatprep.subr.mxu0 0.0
      %1003 = vmatpush1.msra.mxu0 %v847
      %1004 = vmatprep.subr.mxu0 0.0
      %1005 = vmatpush1.msra.mxu0 %v848
      %1006 = vmatprep.subr.mxu0 0.0
      %1007 = vmatpush1.msra.mxu0 %v849
      %1008 = vmatprep.subr.mxu0 0.0
      %1009 = vmatpush1.msra.mxu0 %v850
      %1010 = vmatprep.subr.mxu0 0.0
      %1011 = vmatpush1.msra.mxu0 %v851
      %1012 = vmatprep.subr.mxu0 0.0
      %1013 = vmatpush1.msra.mxu0 %v852
      %1014 = vmatprep.subr.mxu0 0.0
      %1015 = vmatpush1.msra.mxu0 %v853
      %1016 = vmatprep.subr.mxu0 0.0
      %1017 = vmatpush1.msra.mxu0 %v854
      %1018 = vmatprep.subr.mxu0 0.0
      %1019 = vmatpush1.msra.mxu0 %v855
      %1020 = vmatprep.subr.mxu0 0.0
      %1021 = vmatpush1.msra.mxu0 %v856
      %1022 = vmatprep.subr.mxu0 0.0
      %1023 = vmatpush1.msra.mxu0 %v857
      %1024 = vmatprep.subr.mxu0 0.0
      %1025 = vmatpush1.msra.mxu0 %v858
      %1026 = vmatprep.subr.mxu0 0.0
      %1027 = vmatpush1.msra.mxu0 %v859
      %1028 = vmatprep.subr.mxu0 0.0
      %1029 = vmatpush1.msra.mxu0 %v860
      %1030 = vmatprep.subr.mxu0 0.0
      %1031 = vmatpush1.msra.mxu0 %v861
      %1032 = vmatprep.subr.mxu0 0.0
      %1033 = vmatpush1.msra.mxu0 %v862
      %1034 = vmatprep.subr.mxu0 0.0
      %1035 = vmatpush1.msra.mxu0 %v863
      %1036 = vmatprep.subr.mxu0 0.0
      %1037 = vmatpush1.msra.mxu0 %v864
      %1038 = vmatprep.mubr.f32.mxu0 %v798
      %1039 = vmatmul.mubr.f32.gmra.mrb[0].mxu0 %v797
      %v1040 = vpop.f32.mrb[0].mxu0
      %v1041 = vadd.f32 %v971, %v1040
      %v1042 = vpop.f32.mrb[0].mxu0
      %1043 = vdwg.mxu0
      %1044 = vmatprep.subr.mxu0 0.0
      %1045 = vmatpush1.msra.mxu0 %v865
      %1046 = vmatprep.subr.mxu0 0.0
      %1047 = vmatpush1.msra.mxu0 %v866
      %1048 = vmatprep.subr.mxu0 0.0
      %1049 = vmatpush1.msra.mxu0 %v867
      %1050 = vmatprep.subr.mxu0 0.0
      %1051 = vmatpush1.msra.mxu0 %v868
      %1052 = vmatprep.subr.mxu0 0.0
      %1053 = vmatpush1.msra.mxu0 %v869
      %1054 = vmatprep.subr.mxu0 0.0
      %1055 = vmatpush1.msra.mxu0 %v870
      %1056 = vmatprep.subr.mxu0 0.0
      %1057 = vmatpush1.msra.mxu0 %v871
      %1058 = vmatprep.subr.mxu0 0.0
      %1059 = vmatpush1.msra.mxu0 %v872
      %1060 = vmatprep.subr.mxu0 0.0
      %1061 = vmatpush1.msra.mxu0 %v873
      %1062 = vmatprep.subr.mxu0 0.0
      %1063 = vmatpush1.msra.mxu0 %v874
      %1064 = vmatprep.subr.mxu0 0.0
      %1065 = vmatpush1.msra.mxu0 %v875
      %1066 = vmatprep.subr.mxu0 0.0
      %1067 = vmatpush1.msra.mxu0 %v876
      %1068 = vmatprep.subr.mxu0 0.0
      %1069 = vmatpush1.msra.mxu0 %v877
      %1070 = vmatprep.subr.mxu0 0.0
      %1071 = vmatpush1.msra.mxu0 %v878
      %1072 = vmatprep.subr.mxu0 0.0
      %1073 = vmatpush1.msra.mxu0 %v879
      %1074 = vmatprep.subr.mxu0 0.0
      %1075 = vmatpush1.msra.mxu0 %v880
      %1076 = vmatprep.subr.mxu0 0.0
      %1077 = vmatpush1.msra.mxu0 %v881
      %1078 = vmatprep.subr.mxu0 0.0
      %1079 = vmatpush1.msra.mxu0 %v882
      %1080 = vmatprep.subr.mxu0 0.0
      %1081 = vmatpush1.msra.mxu0 %v883
      %1082 = vmatprep.subr.mxu0 0.0
      %1083 = vmatpush1.msra.mxu0 %v884
      %1084 = vmatprep.subr.mxu0 0.0
      %1085 = vmatpush1.msra.mxu0 %v885
      %1086 = vmatprep.subr.mxu0 0.0
      %1087 = vmatpush1.msra.mxu0 %v886
      %1088 = vmatprep.subr.mxu0 0.0
      %1089 = vmatpush1.msra.mxu0 %v887
      %1090 = vmatprep.subr.mxu0 0.0
      %1091 = vmatpush1.msra.mxu0 %v888
      %1092 = vmatprep.subr.mxu0 0.0
      %1093 = vmatpush1.msra.mxu0 %v889
      %1094 = vmatprep.subr.mxu0 0.0
      %1095 = vmatpush1.msra.mxu0 %v890
      %1096 = vmatprep.subr.mxu0 0.0
      %1097 = vmatpush1.msra.mxu0 %v891
      %1098 = vmatprep.subr.mxu0 0.0
      %1099 = vmatpush1.msra.mxu0 %v892
      %1100 = vmatprep.subr.mxu0 0.0
      %1101 = vmatpush1.msra.mxu0 %v893
      %1102 = vmatprep.subr.mxu0 0.0
      %1103 = vmatpush1.msra.mxu0 %v894
      %1104 = vmatprep.subr.mxu0 0.0
      %1105 = vmatpush1.msra.mxu0 %v895
      %1106 = vmatprep.subr.mxu0 0.0
      %1107 = vmatpush1.msra.mxu0 %v896
      %1108 = vmatprep.mubr.f32.mxu0 %v800
      %1109 = vmatmul.mubr.f32.gmra.mrb[0].mxu0 %v799
      %v1110 = vpop.f32.mrb[0].mxu0
      %v1111 = vadd.f32 %v1041, %v1110
      %v1112 = vpop.f32.mrb[0].mxu0
      %1113 = vdwg.mxu0
      %1114 = vst [vmem:[#allocation13] sm:$0xff] %v1111
    $region61: #{tpu_custom_call.1} parent=1 // pred_fallthru
      _
    // Predicated region
    $region62: #{tpu_custom_call.1} parent=1 // pred_check
      _
    $region63: #{tpu_custom_call.1} parent=1 // pred_check_branch
      %1116 = sbr.rel (0) target = $region65
    $region64: #{tpu_custom_call.1} parent=1 // pred_region
      %s1118 = ssub.s32 128, 128
      %1119 = vsyncadd [#allocation10], %s1118
      %s1121 = sshll.u32 [#allocation13], 4
      %s1122 = int_to_ptr.vmem [resolvable:$true] %s1121
      %1124 = dma.vmem_to_hbm [thread:$0]  %s1122, 128, %s5, [#allocation10]
    $region65: #{tpu_custom_call.1} parent=1 // pred_fallthru
      _
    // Predicated region
    $region66: #{tpu_custom_call.1} parent=1 // pred_check
      _
    $region67: #{tpu_custom_call.1} parent=1 // pred_check_branch
      %1126 = sbr.rel (0) target = $region69
    $region68: #{tpu_custom_call.1} parent=1 // pred_region
      %1127 = dma.done [#allocation10], 128
    $region69: #{tpu_custom_call.1} parent=1 // pred_fallthru
      _
    %1128 = vsyncpa [#allocation9], 1
    %1129 = vsyncpa [#allocation12], 1
    %1130 = vsyncpa [#allocation10], 1
  %1131 = vsyncmov [#allocation5]
  %s1132 = vpop.sfrf %1131
  %p1133 = scmp.eq.s32.totalorder %s1132, 0
  %p1134 = pneg %p1133
  %1136 = shalt.err (%p1134)
  %s1137 = scalar_lea.sflag [#allocation5], 1
  %1138 = vsyncmov %s1137
  %s1139 = vpop.sfrf %1138
  %p1140 = scmp.eq.s32.totalorder %s1139, 0
  %p1141 = pneg %p1140
  %1143 = shalt.err (%p1141)

</llo_original>
